<compile_context>
chip_gen: v7x
topology: tpu7x:2x2x1
jax: 0.10.0
libtpu: 0.0.40
codegen_flags: <defaults>
</compile_context>

<pallas_src>
import math

import jax
import jax.numpy as jnp
from jax.experimental import pallas as pl
from jax.experimental.pallas import tpu as pltpu


def _layer_scale_kernel(x_ref, gamma_ref, o_ref):
    # Pure VPU elementwise: (tile_rows, tile_d) * (1, tile_d) broadcast multiply.
    o_ref[...] = x_ref[...] * gamma_ref[...]


def _layer_scale_residual_kernel(x_ref, gamma_ref, r_ref, o_ref):
    # Fused LayerScale + residual add (the ViT-block epilogue this feeds).
    o_ref[...] = x_ref[...] * gamma_ref[...] + r_ref[...]


def _vmem_budget_bytes():
    """Generation-aware scoped-VMEM budget with headroom for compiler scratch."""
    try:
        cap = pltpu.get_tpu_info().vmem_capacity_bytes
    except Exception:
        cap = 64 * 1024 * 1024  # conservative (v7x-sized) fallback
    # ~80% of physical and never closer than 8 MiB to the ceiling:
    #   v5e/v6e (128 MiB) -> ~102 MiB; v7x (64 MiB) -> ~51 MiB.
    return max(16 << 20, min(int(0.8 * cap), cap - (8 << 20)))


def layer_scale(x, gamma, *, residual=None, tile_rows=None,
                max_tile_bytes=8 * 1024 * 1024, donate_x=False):
    """LayerScale forward: x * gamma (+ residual), gamma broadcast over last dim.

    x: (..., D), gamma: (D,), residual: optional, same shape as x (fused add).
    Returns an array with x's shape and dtype.  NOTE: gamma / residual are cast
    to x.dtype -- an intentional deviation from PyTorch's promote-to-f32
    `x * self.gamma` when activations are bf16/fp16.
    """
    orig_shape = x.shape
    D = orig_shape[-1]
    x2 = x.reshape(-1, D)
    R = x2.shape[0]
    gamma2 = gamma.reshape(1, D).astype(x.dtype)
    r2 = None if residual is None else residual.reshape(-1, D).astype(x.dtype)

    # ---- Lane-dense folding --------------------------------------------------
    # Whenever D is not a multiple of 128, fold `fold = 128 // gcd(D, 128)`
    # consecutive rows into one so the lane dim becomes a multiple of 128:
    # full-width unmasked vector stores (biggest measured single lever for
    # mem-bound kernels) instead of masked vst.msk partial stores.
    if D % 128 != 0:
        fold = 128 // math.gcd(D, 128)
        if fold > 1 and R % fold == 0:
            R //= fold
            D *= fold
            x2 = x2.reshape(R, D)
            gamma2 = jnp.tile(gamma2, (1, fold))
            if r2 is not None:
                r2 = r2.reshape(R, D)

    itemsize = jnp.dtype(x.dtype).itemsize
    pack = max(8, 32 // itemsize)        # sublane packing: 8 f32, 16 bf16, 32 i8
    n_streams = 2 if r2 is None else 3   # R*D-sized HBM streams (in + out)

    # ---- VMEM / tile byte budgets ---------------------------------------------
    vmem_budget = _vmem_budget_bytes()
    # Each big stream is (at least) double-buffered -> footprint ~ 2*n_streams*tile.
    tile_byte_target = min(max_tile_bytes,
                           (vmem_budget - (1 << 20)) // (2 * n_streams))

    # ---- Column (D) tiling: only when even a minimum-height full-D tile would
    # blow the budget (very wide channel dims); keeps the kernel legal on v7x.
    if D > 128 and pack * D * itemsize > tile_byte_target:
        tile_d = ((tile_byte_target // (pack * itemsize)) // 128) * 128
        tile_d = int(min(D, max(128, tile_d)))
    else:
        tile_d = D

    # ---- Row tiling: as big as the byte budget allows (no arbitrary row cap);
    # per-grid-step overhead is ~0.35us, so bigger tiles => closer to roofline.
    if tile_rows is None:
        tile_rows = max(pack, tile_byte_target // max(1, tile_d * itemsize))
    if tile_rows >= R:
        tile_rows = R                    # full extent is always a legal block
    else:
        tile_rows = max(pack, (tile_rows // pack) * pack)
    tile_rows = int(tile_rows)

    grid_r = pl.cdiv(R, tile_rows)       # ragged last block masked by Pallas
    grid_c = pl.cdiv(D, tile_d)
    tile_bytes = tile_rows * tile_d * itemsize

    # Tiny tiles with many grid steps expose per-step DMA latency; a 3-deep
    # buffer on the big input streams hides it.  At the default multi-MiB tile
    # this would only waste VMEM (especially on v7x), so keep 2-deep buffering.
    deep = pl.Buffered(3) if (tile_bytes < (1 << 20) and grid_r * grid_c >= 16) else None

    def _io_spec():
        if deep is None:
            return pl.BlockSpec((tile_rows, tile_d), lambda i, j: (i, j))
        return pl.BlockSpec((tile_rows, tile_d), lambda i, j: (i, j),
                            pipeline_mode=deep)

    gamma_spec = pl.BlockSpec((1, tile_d), lambda i, j: (0, j))
    in_specs = [_io_spec(), gamma_spec]
    operands = [x2, gamma2]
    kernel = _layer_scale_kernel
    if r2 is not None:
        in_specs.append(_io_spec())
        operands.append(r2)
        kernel = _layer_scale_residual_kernel

    # Exact double/triple-buffered footprint + gamma + slack, clamped to budget.
    b = 3 if deep is not None else 2
    needed = ((b * (n_streams - 1) + 2) * tile_bytes
              + 2 * tile_d * itemsize + (2 << 20))
    vmem_limit = int(min(vmem_budget, max(32 << 20, needed)))

    flops = R * D * (1 if r2 is None else 2)
    bytes_accessed = n_streams * R * D * itemsize + D * itemsize

    out = pl.pallas_call(
        kernel,
        out_shape=jax.ShapeDtypeStruct((R, D), x.dtype),
        grid_spec=pltpu.PrefetchScalarGridSpec(
            num_scalar_prefetch=0,
            grid=(grid_r, grid_c),
            in_specs=in_specs,
            out_specs=pl.BlockSpec((tile_rows, tile_d), lambda i, j: (i, j)),
        ),
        compiler_params=pltpu.CompilerParams(
            # TODO(synk): verify plain "parallel" shards the row axis across
            # both v7x TensorCores; switch to pltpu.CORE_PARALLEL if it does not.
            dimension_semantics=("parallel", "parallel"),
            vmem_limit_bytes=vmem_limit,
        ),
        cost_estimate=pl.CostEstimate(
            flops=flops, transcendentals=0, bytes_accessed=bytes_accessed),
        input_output_aliases=({0: 0} if donate_x else {}),
    )(*operands)

    return out.reshape(orig_shape)


if __name__ == "__main__":
    root = jax.random.PRNGKey(0)
    k0, k1, k2, k3, k4 = jax.random.split(root, 5)

    # 1) Module-typical (batch, seq, hidden) with PyTorch init
    #    (gamma = init_values * ones(dim)); D=32 -> gcd fold to lane width 128.
    B, N, D = 2, 8, 32
    x = jax.random.normal(k0, (B, N, D), dtype=jnp.float32)
    gamma = 1e-5 * jnp.ones((D,), dtype=jnp.float32)
    out = jax.block_until_ready(layer_scale(x, gamma))
    assert out.shape == x.shape and out.dtype == x.dtype
    assert jnp.allclose(out, x * gamma, rtol=1e-6, atol=1e-6)

    # 2) Lane-dense D=128, multi-step ragged row grid (262 rows, 64-row tiles,
    #    5 blocks with a partial tail -> no padding path).
    x_b = jax.random.normal(k1, (2, 131, 128), dtype=jnp.float32)
    gamma_b = jax.random.normal(k2, (128,), dtype=jnp.float32)
    out_b = jax.block_until_ready(layer_scale(x_b, gamma_b, tile_rows=64))
    assert jnp.allclose(out_b, x_b * gamma_b, rtol=1e-6, atol=1e-6)

    # 3) Odd D=96 (gcd fold=4 -> lane width 384), fused residual add, tiny
    #    user tiles so the 3-deep pipeline path is exercised.
    x_c = jax.random.normal(k3, (2, 512, 96), dtype=jnp.float32)
    gamma_c = jax.random.normal(k4, (96,), dtype=jnp.float32)
    res_c = jax.random.normal(k0, (2, 512, 96), dtype=jnp.float32)
    out_c = jax.block_until_ready(
        layer_scale(x_c, gamma_c, residual=res_c, tile_rows=8))
    assert jnp.allclose(out_c, x_c * gamma_c + res_c, rtol=1e-6, atol=1e-6)

    print("KERNEL_OK")
</pallas_src>

<mosaic_0001>
module attributes {stable_mosaic.version = 11 : i64} {
  func.func @_layer_scale_kernel(%arg0: i32, %arg1: i32, %arg2: memref<4x128xf32, #tpu.memory_space<vmem>>, %arg3: memref<1x128xf32, #tpu.memory_space<vmem>>, %arg4: memref<4x128xf32, #tpu.memory_space<vmem>>) attributes {dimension_semantics = [#tpu.dimension_semantics<parallel>, #tpu.dimension_semantics<parallel>], iteration_bounds = array<i64: 1, 1>, scalar_prefetch = 0 : i64, scratch_operands = 0 : i64, tpu.core_type = #tpu.core_type<tc>, window_params = [{transform_indices = @transform_0, window_bounds = array<i64: 4, 128>}, {transform_indices = @transform_1, window_bounds = array<i64: 1, 128>}, {transform_indices = @transform_2, window_bounds = array<i64: 4, 128>}]} {
    %c0 = arith.constant 0 : index
    %c0_0 = arith.constant 0 : index
    %0 = vector.load %arg2[%c0, %c0_0] : memref<4x128xf32, #tpu.memory_space<vmem>>, vector<4x128xf32>
    %c0_1 = arith.constant 0 : index
    %c0_2 = arith.constant 0 : index
    %1 = vector.load %arg3[%c0_1, %c0_2] : memref<1x128xf32, #tpu.memory_space<vmem>>, vector<1x128xf32>
    %2 = vector.broadcast %1 : vector<1x128xf32> to vector<4x128xf32>
    %3 = arith.mulf %0, %2 : vector<4x128xf32>
    %c0_3 = arith.constant 0 : index
    %c0_4 = arith.constant 0 : index
    %4 = vector.load %arg4[%c0_3, %c0_4] : memref<4x128xf32, #tpu.memory_space<vmem>>, vector<4x128xf32>
    tpu.vector_store %arg4[%c0_3, %c0_4], %3 {strides = array<i32>} : memref<4x128xf32, #tpu.memory_space<vmem>>, vector<4x128xf32>,
    return
  }
  func.func @transform_0(%arg0: i32, %arg1: i32) -> (i32, i32) {
    %c0_i32 = arith.constant 0 : i32
    return %arg0, %arg1 : i32, i32
  }
  func.func @transform_1(%arg0: i32, %arg1: i32) -> (i32, i32) {
    %c0_i32 = arith.constant 0 : i32
    %c0_i32_0 = arith.constant 0 : i32
    return %c0_i32, %arg1 : i32, i32
  }
  func.func @transform_2(%arg0: i32, %arg1: i32) -> (i32, i32) {
    %c0_i32 = arith.constant 0 : i32
    return %arg0, %arg1 : i32, i32
  }
}

</mosaic_0001>

<llo_original>
// kernel: tpu_custom_call.1
$region0: #{tpu_custom_call.1}
  #allocation0 [shape = 'u32[]', space=smem, size = 0x4, offset = 0x4, fixed_abs, tag = 'smem constant byte address 0x4 - core index']
  #allocation1 [shape = 'u32[144,128]{1,0:T(1,128)}', space=vmem, size = 0x12000, scoped, tag = 'internal scratch']
  %s0 = inlined_call_operand.hbm [shape: f32[4,128], index: 0, kind: input, shape index: {}]
  %s1 = inlined_call_operand.vmem [shape: f32[1,128], index: 1, kind: input, shape index: {}]
  %s2 = inlined_call_operand.hbm [shape: f32[4,128], index: 2, kind: output, shape index: {}]
  %s3 = sld [smem:[#allocation0]]
  $region22: #{tpu_custom_call.1} parent=0
    _
  %s5 = ssub.s32 1, %s3
  %s6 = scalar_select 0, %s5, %s3
  $region1: #{tpu_custom_call.1} parent=0
    #allocation2 [shape = 'u8[2048]{0}', space=vmem, size = 0x800, scoped, tag = 'input window, operand 0, single buffered']
    #allocation3 [shape = 's32[1]{0}', space=sflag, size = 0x4, scoped, tag = 'scoped memory for tpu_custom_call.1']
    #allocation4 [shape = 's32[1]{0}', space=sflag, size = 0x4, scoped, tag = 'scoped memory for tpu_custom_call.1']
    #allocation5 [shape = 'u8[2048]{0}', space=vmem, size = 0x800, scoped, tag = 'output window, operand 0, single buffered']
    %7 = vsyncpa [#allocation3], 0
    %8 = vsyncpa [#allocation4], 0
    // Predicated region
    $region2: #{tpu_custom_call.1} parent=1 // pred_check
      _
    $region3: #{tpu_custom_call.1} parent=1 // pred_check_branch
      %10 = sbr.rel (0) target = $region5
    $region4: #{tpu_custom_call.1} parent=1 // pred_region
      %s12 = ssub.s32 64, 64
      %13 = vsyncadd [#allocation3], %s12
      %s15 = sshll.u32 [#allocation2], 4
      %s16 = int_to_ptr.vmem [resolvable:$true] %s15
      %18 = dma.hbm_to_vmem [thread:$0]  %s0, 64, %s16, [#allocation3]
    $region5: #{tpu_custom_call.1} parent=1 // pred_fallthru
      _
    // Predicated region
    $region6: #{tpu_custom_call.1} parent=1 // pred_check
      _
    $region7: #{tpu_custom_call.1} parent=1 // pred_check_branch
      %20 = sbr.rel (0) target = $region9
    $region8: #{tpu_custom_call.1} parent=1 // pred_region
      _
    $region9: #{tpu_custom_call.1} parent=1 // pred_fallthru
      _
    // Predicated region
    $region10: #{tpu_custom_call.1} parent=1 // pred_check
      _
    $region11: #{tpu_custom_call.1} parent=1 // pred_check_branch
      %22 = sbr.rel (0) target = $region13
    $region12: #{tpu_custom_call.1} parent=1 // pred_region
      %23 = dma.done [#allocation3], 64
    $region13: #{tpu_custom_call.1} parent=1 // pred_fallthru
      _
    %v24 = vld [vmem:[#allocation2] sm:$0xf]
    %v25 = vld [vmem:[%s1] sm:$0x1]
    %v27 = vlaneseq
    %v28 = vshrl.u32 %v27, 7
    %v29 = vsub.s32 0, %v28
    %v30 = vrot.slane %v25, %v29
    %v32 = vmul.f32 %v24, %v30
    %33 = vst [vmem:[#allocation5] sm:$0xf] %v32
    // Predicated region
    $region14: #{tpu_custom_call.1} parent=1 // pred_check
      _
    $region15: #{tpu_custom_call.1} parent=1 // pred_check_branch
      %35 = sbr.rel (0) target = $region17
    $region16: #{tpu_custom_call.1} parent=1 // pred_region
      %s37 = ssub.s32 64, 64
      %38 = vsyncadd [#allocation4], %s37
      %s40 = sshll.u32 [#allocation5], 4
      %s41 = int_to_ptr.vmem [resolvable:$true] %s40
      %43 = dma.vmem_to_hbm [thread:$0]  %s41, 64, %s2, [#allocation4]
    $region17: #{tpu_custom_call.1} parent=1 // pred_fallthru
      _
    // Predicated region
    $region18: #{tpu_custom_call.1} parent=1 // pred_check
      _
    $region19: #{tpu_custom_call.1} parent=1 // pred_check_branch
      %45 = sbr.rel (0) target = $region21
    $region20: #{tpu_custom_call.1} parent=1 // pred_region
      %46 = dma.done [#allocation4], 64
    $region21: #{tpu_custom_call.1} parent=1 // pred_fallthru
      _
    %47 = vsyncpa [#allocation3], 1
    %48 = vsyncpa [#allocation4], 1

</llo_original>
